<compile_context>
chip_gen: v7x
topology: tpu7x:2x2x1
jax: 0.10.0
libtpu: 0.0.40
codegen_flags: <defaults>
</compile_context>

<pallas_src>
import numpy as np
import jax
import jax.numpy as jnp
from jax.experimental import pallas as pl
from jax.experimental.pallas import tpu as pltpu


# ----------------------------------------------------------------------------- #
# Pallas kernel: per-example sum of squared differences over the feature dim
# ----------------------------------------------------------------------------- #
def _mse_rowsum_kernel(y_ref, z_ref, out_ref):
    # y_ref, z_ref: (TB, TD) input tiles
    # out_ref:      (TB, 1)  per-row accumulator (revisited across the D axis)
    j = pl.program_id(1)

    @pl.when(j == 0)
    def _():
        out_ref[...] = jnp.zeros_like(out_ref)

    d = y_ref[...].astype(jnp.float32) - z_ref[...].astype(jnp.float32)
    out_ref[...] += jnp.sum(d * d, axis=1, keepdims=True)


def _round_up(x, m):
    return ((x + m - 1) // m) * m


def _mse_row_sums_pallas(y2, z2, *, max_tb=128, max_td=2048):
    """y2, z2: (B, D). Returns (B_pad, 1) f32 per-row sum of squared diffs
    (padded rows are exactly zero)."""
    B, D = y2.shape

    # Tile sizes: multiples of (8, 128); padded extents divide evenly by the tile.
    TB = min(_round_up(B, 8), max_tb)
    TD = min(_round_up(D, 128), max_td)
    B_pad = _round_up(B, TB)
    D_pad = _round_up(D, TD)
    if (B_pad, D_pad) != (B, D):
        pad = ((0, B_pad - B), (0, D_pad - D))
        y2 = jnp.pad(y2, pad)   # zero padding -> zero contribution to the sum
        z2 = jnp.pad(z2, pad)

    grid = (B_pad // TB, D_pad // TD)

    grid_spec = pl.GridSpec(
        grid=grid,
        in_specs=[
            pl.BlockSpec((TB, TD), lambda i, j: (i, j)),
            pl.BlockSpec((TB, TD), lambda i, j: (i, j)),
        ],
        out_specs=pl.BlockSpec((TB, 1), lambda i, j: (i, 0)),
    )

    row_sums = pl.pallas_call(
        _mse_rowsum_kernel,
        out_shape=jax.ShapeDtypeStruct((B_pad, 1), jnp.float32),
        grid_spec=grid_spec,
        compiler_params=pltpu.CompilerParams(
            # B axis independent (megacore-shardable on v7x); D axis is the
            # reduction into the revisited output block -> arbitrary, last.
            dimension_semantics=("parallel", "arbitrary"),
        ),
    )(y2, z2)
    return row_sums


# ----------------------------------------------------------------------------- #
# Module forward: MSELoss().forward(Y, Z)
# ----------------------------------------------------------------------------- #
def mse_loss(Y, Z):
    assert Y.shape == Z.shape, "Y and Z must have the same shape"
    assert Y.ndim >= 2, "need at least two trailing dims to sum over"
    lead = Y.shape[:-2]
    B = int(np.prod(lead)) if lead else 1          # mean is over leading dims only
    D = Y.shape[-2] * Y.shape[-1]

    y2 = Y.reshape(B, D)
    z2 = Z.reshape(B, D)

    row_sums = _mse_row_sums_pallas(y2, z2)        # (B_pad, 1); padded rows are 0
    return jnp.sum(row_sums) / jnp.float32(B)      # divide by the TRUE batch size


class MSELoss:
    """Mirror of the PyTorch module: reduction 'mean' over the batch direction only."""

    def __call__(self, Y, Z):
        return mse_loss(Y, Z)


# ----------------------------------------------------------------------------- #
# Demo / correctness check
# ----------------------------------------------------------------------------- #
if __name__ == "__main__":
    loss_fn = MSELoss()
    key = jax.random.PRNGKey(0)

    # Case 1: lane-aligned small shapes (B=4, F=8, T=16 -> D=128, no padding path).
    k1, k2, k3, k4 = jax.random.split(key, 4)
    Y1 = jax.random.normal(k1, (4, 8, 16), jnp.float32)
    Z1 = jax.random.normal(k2, (4, 8, 16), jnp.float32)
    loss1 = loss_fn(Y1, Z1)
    jax.block_until_ready(loss1)
    ref1 = jnp.mean(jnp.sum((Y1 - Z1) ** 2, axis=(-1, -2)))

    # Case 2: ragged shapes (B=6, F=5, T=7 -> D=35) exercising the zero-pad path.
    Y2 = jax.random.normal(k3, (6, 5, 7), jnp.float32)
    Z2 = jax.random.normal(k4, (6, 5, 7), jnp.float32)
    loss2 = loss_fn(Y2, Z2)
    jax.block_until_ready(loss2)
    ref2 = jnp.mean(jnp.sum((Y2 - Z2) ** 2, axis=(-1, -2)))

    assert np.allclose(float(loss1), float(ref1), rtol=1e-5, atol=1e-5), (loss1, ref1)
    assert np.allclose(float(loss2), float(ref2), rtol=1e-5, atol=1e-5), (loss2, ref2)

    print("KERNEL_OK")
</pallas_src>

<mosaic_0001>
module attributes {stable_mosaic.version = 11 : i64} {
  func.func @_mse_rowsum_kernel(%arg0: i32, %arg1: i32, %arg2: memref<8x128xf32, #tpu.memory_space<vmem>>, %arg3: memref<8x128xf32, #tpu.memory_space<vmem>>, %arg4: memref<8x1xf32, #tpu.memory_space<vmem>>) attributes {dimension_semantics = [#tpu.dimension_semantics<parallel>, #tpu.dimension_semantics<arbitrary>], iteration_bounds = array<i64: 1, 1>, scalar_prefetch = 0 : i64, scratch_operands = 0 : i64, tpu.core_type = #tpu.core_type<tc>, window_params = [{transform_indices = @transform_0, window_bounds = array<i64: 8, 128>}, {transform_indices = @transform_1, window_bounds = array<i64: 8, 128>}, {transform_indices = @transform_2, window_bounds = array<i64: 8, 1>}]} {
    %c0_i32 = arith.constant 0 : i32
    %0 = arith.cmpi eq, %arg1, %c0_i32 : i32
    %1 = arith.extui %0 : i1 to i32
    %c0_i32_0 = arith.constant 0 : i32
    %2 = arith.cmpi ne, %1, %c0_i32_0 : i32
    scf.if %2 {
      %cst_8 = arith.constant 0.000000e+00 : f32
      %12 = vector.broadcast %cst_8 : f32 to vector<8x1xf32>
      %c0_9 = arith.constant 0 : index
      %c0_10 = arith.constant 0 : index
      %13 = vector.load %arg4[%c0_9, %c0_10] : memref<8x1xf32, #tpu.memory_space<vmem>>, vector<8x1xf32>
      tpu.vector_store %arg4[%c0_9, %c0_10], %12 {strides = array<i32>} : memref<8x1xf32, #tpu.memory_space<vmem>>, vector<8x1xf32>,
    } else {
    }
    %c0 = arith.constant 0 : index
    %c0_1 = arith.constant 0 : index
    %3 = vector.load %arg2[%c0, %c0_1] : memref<8x128xf32, #tpu.memory_space<vmem>>, vector<8x128xf32>
    %c0_2 = arith.constant 0 : index
    %c0_3 = arith.constant 0 : index
    %4 = vector.load %arg3[%c0_2, %c0_3] : memref<8x128xf32, #tpu.memory_space<vmem>>, vector<8x128xf32>
    %5 = arith.subf %3, %4 : vector<8x128xf32>
    %c0_4 = arith.constant 0 : index
    %c0_5 = arith.constant 0 : index
    %6 = vector.load %arg4[%c0_4, %c0_5] : memref<8x1xf32, #tpu.memory_space<vmem>>, vector<8x1xf32>
    %7 = arith.mulf %5, %5 : vector<8x128xf32>
    %cst = arith.constant dense<0.000000e+00> : vector<8xf32>
    %8 = vector.multi_reduction <add>, %7, %cst [1] : vector<8x128xf32> to vector<8xf32>
    %9 = vector.shape_cast %8 : vector<8xf32> to vector<8x1xf32>
    %10 = arith.addf %6, %9 : vector<8x1xf32>
    %c0_6 = arith.constant 0 : index
    %c0_7 = arith.constant 0 : index
    %11 = vector.load %arg4[%c0_6, %c0_7] : memref<8x1xf32, #tpu.memory_space<vmem>>, vector<8x1xf32>
    tpu.vector_store %arg4[%c0_6, %c0_7], %10 {strides = array<i32>} : memref<8x1xf32, #tpu.memory_space<vmem>>, vector<8x1xf32>,
    return
  }
  func.func @transform_0(%arg0: i32, %arg1: i32) -> (i32, i32) {
    %c0_i32 = arith.constant 0 : i32
    return %arg0, %arg1 : i32, i32
  }
  func.func @transform_1(%arg0: i32, %arg1: i32) -> (i32, i32) {
    %c0_i32 = arith.constant 0 : i32
    return %arg0, %arg1 : i32, i32
  }
  func.func @transform_2(%arg0: i32, %arg1: i32) -> (i32, i32) {
    %c0_i32 = arith.constant 0 : i32
    %c0_i32_0 = arith.constant 0 : i32
    return %arg0, %c0_i32 : i32, i32
  }
}

</mosaic_0001>

<llo_original>
// kernel: tpu_custom_call.1
$region0: #{tpu_custom_call.1}
  #allocation0 [shape = 'u32[]', space=smem, size = 0x4, offset = 0x4, fixed_abs, tag = 'smem constant byte address 0x4 - core index']
  #allocation1 [shape = 'u32[144,128]{1,0:T(1,128)}', space=vmem, size = 0x12000, scoped, tag = 'internal scratch']
  %s0 = inlined_call_operand.hbm [shape: f32[8,128], index: 0, kind: input, shape index: {}]
  %s1 = inlined_call_operand.hbm [shape: f32[8,128], index: 1, kind: input, shape index: {}]
  %s2 = inlined_call_operand.vmem [shape: f32[8,1], index: 2, kind: output, shape index: {}]
  %s3 = sld [smem:[#allocation0]]
  $region30: #{tpu_custom_call.1} parent=0
    _
  %s5 = ssub.s32 1, %s3
  %s6 = scalar_select 0, %s5, %s3
  $region1: #{tpu_custom_call.1} parent=0
    #allocation2 [shape = 'u8[4096]{0}', space=vmem, size = 0x1000, scoped, tag = 'input window, operand 0, single buffered']
    #allocation3 [shape = 's32[1]{0}', space=sflag, size = 0x4, scoped, tag = 'scoped memory for tpu_custom_call.1']
    #allocation4 [shape = 'u8[4096]{0}', space=vmem, size = 0x1000, scoped, tag = 'input window, operand 1, single buffered']
    #allocation5 [shape = 's32[1]{0}', space=sflag, size = 0x4, scoped, tag = 'scoped memory for tpu_custom_call.1']
    %7 = vsyncpa [#allocation3], 0
    %8 = vsyncpa [#allocation5], 0
    // Predicated region
    $region2: #{tpu_custom_call.1} parent=1 // pred_check
      _
    $region3: #{tpu_custom_call.1} parent=1 // pred_check_branch
      %10 = sbr.rel (0) target = $region5
    $region4: #{tpu_custom_call.1} parent=1 // pred_region
      %s12 = ssub.s32 128, 128
      %13 = vsyncadd [#allocation3], %s12
      %s15 = sshll.u32 [#allocation2], 4
      %s16 = int_to_ptr.vmem [resolvable:$true] %s15
      %18 = dma.hbm_to_vmem [thread:$0]  %s0, 128, %s16, [#allocation3]
    $region5: #{tpu_custom_call.1} parent=1 // pred_fallthru
      _
    // Predicated region
    $region6: #{tpu_custom_call.1} parent=1 // pred_check
      _
    $region7: #{tpu_custom_call.1} parent=1 // pred_check_branch
      %20 = sbr.rel (0) target = $region9
    $region8: #{tpu_custom_call.1} parent=1 // pred_region
      %s22 = ssub.s32 128, 128
      %23 = vsyncadd [#allocation5], %s22
      %s25 = sshll.u32 [#allocation4], 4
      %s26 = int_to_ptr.vmem [resolvable:$true] %s25
      %28 = dma.hbm_to_vmem [thread:$0]  %s1, 128, %s26, [#allocation5]
    $region9: #{tpu_custom_call.1} parent=1 // pred_fallthru
      _
    // Predicated region
    $region10: #{tpu_custom_call.1} parent=1 // pred_check
      _
    $region11: #{tpu_custom_call.1} parent=1 // pred_check_branch
      %30 = sbr.rel (0) target = $region13
    $region12: #{tpu_custom_call.1} parent=1 // pred_region
      %31 = dma.done [#allocation3], 128
    $region13: #{tpu_custom_call.1} parent=1 // pred_fallthru
      _
    // Predicated region
    $region14: #{tpu_custom_call.1} parent=1 // pred_check
      _
    $region15: #{tpu_custom_call.1} parent=1 // pred_check_branch
      %33 = sbr.rel (0) target = $region17
    $region16: #{tpu_custom_call.1} parent=1 // pred_region
      %34 = dma.done [#allocation5], 128
    $region17: #{tpu_custom_call.1} parent=1 // pred_fallthru
      _
    %p35 = scmp.eq.s32.totalorder 0, 0
    // Predicated region
    $region18: #{tpu_custom_call.1} parent=1 // pred_check
      %p36 = pneg %p35
    $region19: #{tpu_custom_call.1} parent=1 // pred_check_branch
      %38 = sbr.rel (%p36) target = $region21
    $region20: #{tpu_custom_call.1} parent=1 // pred_region
      %vm39 = vcmask 7168
      %40 = vst.msk [vmem:[%s2] sm:$0xff] %vm39, 0.0
    $region21: #{tpu_custom_call.1} parent=1 // pred_fallthru
      _
    %v41 = vld [vmem:[#allocation2] sm:$0xff]
    %v42 = vld [vmem:[#allocation4] sm:$0xff]
    %v43 = vsub.f32 %v41, %v42
    %v44 = vld [vmem:[%s2] sm:$0xff]
    %v45 = vmul.f32 %v43, %v43
    %46 = vadd.xlane.f32.xlu0 %v45
    %v47 = vpop.xlane.xlu0 %46
    %v48 = vadd.f32 %v44, %v47
    %vm49 = vcmask 7168
    %50 = vst.msk [vmem:[%s2] sm:$0xff] %vm49, %v48
    // Predicated region
    $region22: #{tpu_custom_call.1} parent=1 // pred_check
      _
    $region23: #{tpu_custom_call.1} parent=1 // pred_check_branch
      %52 = sbr.rel (0) target = $region25
    $region24: #{tpu_custom_call.1} parent=1 // pred_region
      _
    $region25: #{tpu_custom_call.1} parent=1 // pred_fallthru
      _
    // Predicated region
    $region26: #{tpu_custom_call.1} parent=1 // pred_check
      _
    $region27: #{tpu_custom_call.1} parent=1 // pred_check_branch
      %54 = sbr.rel (0) target = $region29
    $region28: #{tpu_custom_call.1} parent=1 // pred_region
      _
    $region29: #{tpu_custom_call.1} parent=1 // pred_fallthru
      _
    %55 = vsyncpa [#allocation3], 1
    %56 = vsyncpa [#allocation5], 1

</llo_original>
